<compile_context>
chip_gen: v5e
topology: v5e:2x2
jax: 0.10.0
libtpu: 0.0.40
codegen_flags: <defaults>
</compile_context>

<pallas_src>
import functools
import math

import jax
import jax.numpy as jnp
from jax.experimental import pallas as pl
from jax.experimental.pallas import tpu as pltpu


def _conv_block_kernel(x_ref, w_ref, b_ref, mask_ref, o_ref, col_ref, *,
                       lane, cmax, cout, nb_layers, tap_specs, lrelu_a,
                       matmul_dtype):
    # x_ref:    (cmax, lane)               channel-padded input, batch folded into lanes
    # w_ref:    (nb_layers, cout, K)       packed weights, K = KH*KW*cmax
    # b_ref:    (nb_layers, cout, 1)       biases
    # mask_ref: (KH*KW, lane)              f32 {0,1} zero-padding boundary masks
    # o_ref:    (cout, lane)               output (lane-dense)
    # col_ref:  (K, lane)  VMEM scratch    im2col operand, built tap by tap
    act = x_ref[...].astype(jnp.float32)                       # (cmax, lane)

    for layer in range(nb_layers):
        # Build im2col incrementally: one lane-roll (XLU) + optional mask mul
        # (VPU) + one aligned sublane store per tap.  Only ~one tap is live in
        # vregs at any time.
        for t, (d, needs_mask) in enumerate(tap_specs):
            if d == 0:
                shifted = act
            else:
                # shifted[:, p] = act[:, (p + d) mod lane]; wraps (incl. cross-
                # image ones) are zeroed by the boundary mask below.
                shifted = pltpu.roll(act, shift=(-d) % lane, axis=1)
            if needs_mask:
                shifted = shifted * mask_ref[pl.ds(t, 1), :]    # (1, lane) bcast
            col_ref[pl.ds(t * cmax, cmax), :] = shifted

        wl = w_ref[layer]                                       # (cout, K)
        col = col_ref[...]                                      # (K, lane)
        if matmul_dtype is not None:
            wl = wl.astype(matmul_dtype)
            col = col.astype(matmul_dtype)
        acc = jax.lax.dot_general(                              # one MXU matmul/layer
            wl, col,
            dimension_numbers=(((1,), (0,)), ((), ())),
            preferred_element_type=jnp.float32)                 # (cout, lane)

        y = acc + b_ref[layer]                                  # bias: (cout,1) bcast add
        y = jnp.where(y > 0, y, lrelu_a * y)                    # LeakyReLU (VPU)

        if layer == nb_layers - 1:
            o_ref[...] = y.astype(o_ref.dtype)
        else:
            if cout < cmax:
                # Only reached when output_channels < 8-rounded max channel count.
                y = jnp.concatenate(
                    [y, jnp.zeros((cmax - cout, lane), jnp.float32)], axis=0)
            act = y


def _pack_weights(params, cmax, KH, KW):
    """(OIHW weight, bias) per layer -> (L, Cout, KH*KW*cmax), (L, Cout, 1)."""
    w_rows, b_rows = [], []
    for (w, b) in params:
        cout, cin_l = w.shape[0], w.shape[1]
        wt = jnp.transpose(w, (0, 2, 3, 1))                     # (Cout, KH, KW, Cin_l)
        wt = jnp.pad(wt, ((0, 0), (0, 0), (0, 0), (0, cmax - cin_l)))
        w_rows.append(wt.reshape(cout, KH * KW * cmax))
        b_rows.append(b[:, None])
    return jnp.stack(w_rows, axis=0), jnp.stack(b_rows, axis=0)


def _build_tap_masks(H, W, KH, KW, pad, NT):
    """Per-tap zero-padding boundary masks, tiled over the batch tile."""
    HW = H * W
    idx = jnp.arange(HW)
    row = idx // W
    col = idx % W
    masks, specs = [], []
    for kh in range(KH):
        dy = kh - pad
        for kw in range(KW):
            dx = kw - pad
            d = dy * W + dx                                     # flattened shift
            m = jnp.ones((HW,), bool)
            if dy > 0:
                m = m & (row < (H - dy))
            elif dy < 0:
                m = m & (row >= -dy)
            if dx > 0:
                m = m & (col < (W - dx))
            elif dx < 0:
                m = m & (col >= -dx)
            masks.append(m)
            specs.append((d, bool(dy != 0 or dx != 0)))
    mask = jnp.stack(masks, axis=0).astype(jnp.float32)         # (KH*KW, HW)
    mask = jnp.tile(mask, (1, NT))                              # (KH*KW, NT*HW)
    return mask, tuple(specs)


def conv2dblock_forward(x_nchw, params, *, kernel_size=3, stride=1, padding=1,
                        lrelu_a=0.01, matmul_dtype=None):
    """Forward pass matching the PyTorch module (NCHW in, NCHW out)."""
    if stride != 1 or 2 * padding != kernel_size - 1:
        # TODO(synk): general stride / non-"same" padding needs a different
        # (strided / shrinking) tiling; module defaults (3,1,1) are covered.
        raise NotImplementedError("only stride=1, 'same' padding supported")

    N, Cin, H, W = x_nchw.shape
    Cout = params[0][0].shape[0]
    HW = H * W
    KH = KW = kernel_size
    nb_layers = len(params)

    # Channel-pad target: multiple of 8 sublanes, covers all layers' Cin.
    cmax = -(-max(Cin, Cout) // 8) * 8
    K = KH * KW * cmax

    # Batch tiling: at most 2 grid steps (== v7x TC count); NT images per step.
    num_steps = 2 if N >= 2 else 1
    NT = -(-N // num_steps)
    if num_steps > 1 and (NT * HW) % 128 != 0:
        num_steps, NT = 1, N                                    # full-array lane block
    N_pad = num_steps * NT
    lane = NT * HW

    xp = x_nchw
    if N_pad > N:
        xp = jnp.pad(xp, ((0, N_pad - N), (0, 0), (0, 0), (0, 0)))
    # (N, C, H, W) -> (cmax, N*HW): channels on sublanes, batch*spatial on lanes.
    x_flat = jnp.transpose(xp, (1, 0, 2, 3)).reshape(Cin, N_pad * HW)
    x_flat = jnp.pad(x_flat, ((0, cmax - Cin), (0, 0)))

    w_packed, b_packed = _pack_weights(params, cmax, KH, KW)
    mask, tap_specs = _build_tap_masks(H, W, KH, KW, padding, NT)

    kernel = functools.partial(
        _conv_block_kernel, lane=lane, cmax=cmax, cout=Cout,
        nb_layers=nb_layers, tap_specs=tap_specs, lrelu_a=lrelu_a,
        matmul_dtype=matmul_dtype)

    out_flat = pl.pallas_call(
        kernel,
        out_shape=jax.ShapeDtypeStruct((Cout, N_pad * HW), x_nchw.dtype),
        grid=(num_steps,),
        in_specs=[
            pl.BlockSpec((cmax, lane), lambda g: (0, g)),
            pl.BlockSpec((nb_layers, Cout, K), lambda g: (0, 0, 0)),
            pl.BlockSpec((nb_layers, Cout, 1), lambda g: (0, 0, 0)),
            pl.BlockSpec((KH * KW, lane), lambda g: (0, 0)),
        ],
        out_specs=pl.BlockSpec((Cout, lane), lambda g: (0, g)),
        scratch_shapes=[pltpu.VMEM((K, lane), jnp.float32)],
        compiler_params=pltpu.CompilerParams(
            dimension_semantics=("parallel",)),
    )(x_flat, w_packed, b_packed, mask)

    out = out_flat.reshape(Cout, N_pad, HW)
    out = jnp.transpose(out, (1, 0, 2))[:N].reshape(N, Cout, H, W)
    return out


def init_conv2dblock_params(key, nb_layers, input_channels, output_channels,
                            kernel_size=3):
    """Deterministic synthetic parameters (PyTorch-style uniform fan-in init),
    stored in PyTorch OIHW layout."""
    params = []
    for idx in range(nb_layers):
        cin = output_channels if idx > 0 else input_channels
        key, kw_, kb_ = jax.random.split(key, 3)
        fan_in = cin * kernel_size * kernel_size
        bound = 1.0 / math.sqrt(fan_in)
        w = jax.random.uniform(
            kw_, (output_channels, cin, kernel_size, kernel_size),
            jnp.float32, minval=-bound, maxval=bound)
        b = jax.random.uniform(kb_, (output_channels,), jnp.float32,
                               minval=-bound, maxval=bound)
        params.append((w, b))
    return params


if __name__ == "__main__":
    key = jax.random.PRNGKey(0)
    kx, kp = jax.random.split(key)

    # conv2dblock(nb_layers=2, input_channels=4, output_channels=8)
    nb_layers, cin, cout = 2, 4, 8
    x = jax.random.normal(kx, (2, cin, 16, 16), jnp.float32)   # NCHW, like PyTorch

    params = init_conv2dblock_params(kp, nb_layers, cin, cout, kernel_size=3)

    # TODO(synk): use_batchnorm / dropout_ paths are intentionally not
    # implemented (module defaults are off).
    fwd = jax.jit(conv2dblock_forward)
    out = jax.block_until_ready(fwd(x, params))
    assert out.shape == (2, cout, 16, 16), out.shape

    # lightweight reference check against lax.conv for sanity
    ref = x
    for (w, b) in params:
        ref = jax.lax.conv_general_dilated(
            ref, w, window_strides=(1, 1), padding=((1, 1), (1, 1)),
            dimension_numbers=("NCHW", "OIHW", "NCHW")) + b[None, :, None, None]
        ref = jnp.where(ref > 0, ref, 0.01 * ref)
    assert jnp.allclose(out, ref, atol=1e-4, rtol=1e-4)

    print("KERNEL_OK")
</pallas_src>

<mosaic_0001>
module attributes {stable_mosaic.version = 11 : i64} {
  func.func @_conv_block_kernel(%arg0: i32, %arg1: memref<8x256xf32, #tpu.memory_space<vmem>>, %arg2: memref<2x8x72xf32, #tpu.memory_space<vmem>>, %arg3: memref<2x8x1xf32, #tpu.memory_space<vmem>>, %arg4: memref<9x256xf32, #tpu.memory_space<vmem>>, %arg5: memref<8x256xf32, #tpu.memory_space<vmem>>, %arg6: memref<72x256xf32, #tpu.memory_space<vmem>>) attributes {dimension_semantics = [#tpu.dimension_semantics<parallel>], iteration_bounds = array<i64: 2>, scalar_prefetch = 0 : i64, scratch_operands = 1 : i64, tpu.core_type = #tpu.core_type<tc>, window_params = [{transform_indices = @transform_0, window_bounds = array<i64: 8, 256>}, {pipeline_mode = #tpu.pipeline_mode<synchronous>, transform_indices = @transform_1, window_bounds = array<i64: 2, 8, 72>}, {pipeline_mode = #tpu.pipeline_mode<synchronous>, transform_indices = @transform_2, window_bounds = array<i64: 2, 8, 1>}, {pipeline_mode = #tpu.pipeline_mode<synchronous>, transform_indices = @transform_3, window_bounds = array<i64: 9, 256>}, {transform_indices = @transform_4, window_bounds = array<i64: 8, 256>}]} {
    %c0 = arith.constant 0 : index
    %c0_0 = arith.constant 0 : index
    %0 = vector.load %arg1[%c0, %c0_0] : memref<8x256xf32, #tpu.memory_space<vmem>>, vector<8x256xf32>
    %c17_i32 = arith.constant 17 : i32
    %1 = tpu.dynamic_rotate %0 by %c17_i32 dim 1 : vector<8x256xf32>, i32 -> vector<8x256xf32>
    %c0_1 = arith.constant 0 : index
    %c0_2 = arith.constant 0 : index
    %2 = vector.load %arg4[%c0_1, %c0_2] : memref<9x256xf32, #tpu.memory_space<vmem>>, vector<1x256xf32>
    %3 = vector.broadcast %2 : vector<1x256xf32> to vector<8x256xf32>
    %4 = arith.mulf %1, %3 : vector<8x256xf32>
    %c0_3 = arith.constant 0 : index
    %c0_4 = arith.constant 0 : index
    %5 = vector.load %arg6[%c0_3, %c0_4] : memref<72x256xf32, #tpu.memory_space<vmem>>, vector<8x256xf32>
    tpu.vector_store %arg6[%c0_3, %c0_4], %4 {strides = array<i32>} : memref<72x256xf32, #tpu.memory_space<vmem>>, vector<8x256xf32>,
    %c16_i32 = arith.constant 16 : i32
    %6 = tpu.dynamic_rotate %0 by %c16_i32 dim 1 : vector<8x256xf32>, i32 -> vector<8x256xf32>
    %c1 = arith.constant 1 : index
    %c0_5 = arith.constant 0 : index
    %7 = vector.load %arg4[%c1, %c0_5] : memref<9x256xf32, #tpu.memory_space<vmem>>, vector<1x256xf32>
    %8 = vector.broadcast %7 : vector<1x256xf32> to vector<8x256xf32>
    %9 = arith.mulf %6, %8 : vector<8x256xf32>
    %c8 = arith.constant 8 : index
    %c0_6 = arith.constant 0 : index
    %10 = vector.load %arg6[%c8, %c0_6] : memref<72x256xf32, #tpu.memory_space<vmem>>, vector<8x256xf32>
    tpu.vector_store %arg6[%c8, %c0_6], %9 {strides = array<i32>} : memref<72x256xf32, #tpu.memory_space<vmem>>, vector<8x256xf32>,
    %c15_i32 = arith.constant 15 : i32
    %11 = tpu.dynamic_rotate %0 by %c15_i32 dim 1 : vector<8x256xf32>, i32 -> vector<8x256xf32>
    %c2 = arith.constant 2 : index
    %c0_7 = arith.constant 0 : index
    %12 = vector.load %arg4[%c2, %c0_7] : memref<9x256xf32, #tpu.memory_space<vmem>>, vector<1x256xf32>
    %13 = vector.broadcast %12 : vector<1x256xf32> to vector<8x256xf32>
    %14 = arith.mulf %11, %13 : vector<8x256xf32>
    %c16 = arith.constant 16 : index
    %c0_8 = arith.constant 0 : index
    %15 = vector.load %arg6[%c16, %c0_8] : memref<72x256xf32, #tpu.memory_space<vmem>>, vector<8x256xf32>
    tpu.vector_store %arg6[%c16, %c0_8], %14 {strides = array<i32>} : memref<72x256xf32, #tpu.memory_space<vmem>>, vector<8x256xf32>,
    %c1_i32 = arith.constant 1 : i32
    %16 = tpu.dynamic_rotate %0 by %c1_i32 dim 1 : vector<8x256xf32>, i32 -> vector<8x256xf32>
    %c3 = arith.constant 3 : index
    %c0_9 = arith.constant 0 : index
    %17 = vector.load %arg4[%c3, %c0_9] : memref<9x256xf32, #tpu.memory_space<vmem>>, vector<1x256xf32>
    %18 = vector.broadcast %17 : vector<1x256xf32> to vector<8x256xf32>
    %19 = arith.mulf %16, %18 : vector<8x256xf32>
    %c24 = arith.constant 24 : index
    %c0_10 = arith.constant 0 : index
    %20 = vector.load %arg6[%c24, %c0_10] : memref<72x256xf32, #tpu.memory_space<vmem>>, vector<8x256xf32>
    tpu.vector_store %arg6[%c24, %c0_10], %19 {strides = array<i32>} : memref<72x256xf32, #tpu.memory_space<vmem>>, vector<8x256xf32>,
    %c32 = arith.constant 32 : index
    %c0_11 = arith.constant 0 : index
    %21 = vector.load %arg6[%c32, %c0_11] : memref<72x256xf32, #tpu.memory_space<vmem>>, vector<8x256xf32>
    tpu.vector_store %arg6[%c32, %c0_11], %0 {strides = array<i32>} : memref<72x256xf32, #tpu.memory_space<vmem>>, vector<8x256xf32>,
    %c255_i32 = arith.constant 255 : i32
    %22 = tpu.dynamic_rotate %0 by %c255_i32 dim 1 : vector<8x256xf32>, i32 -> vector<8x256xf32>
    %c5 = arith.constant 5 : index
    %c0_12 = arith.constant 0 : index
    %23 = vector.load %arg4[%c5, %c0_12] : memref<9x256xf32, #tpu.memory_space<vmem>>, vector<1x256xf32>
    %24 = vector.broadcast %23 : vector<1x256xf32> to vector<8x256xf32>
    %25 = arith.mulf %22, %24 : vector<8x256xf32>
    %c40 = arith.constant 40 : index
    %c0_13 = arith.constant 0 : index
    %26 = vector.load %arg6[%c40, %c0_13] : memref<72x256xf32, #tpu.memory_space<vmem>>, vector<8x256xf32>
    tpu.vector_store %arg6[%c40, %c0_13], %25 {strides = array<i32>} : memref<72x256xf32, #tpu.memory_space<vmem>>, vector<8x256xf32>,
    %c241_i32 = arith.constant 241 : i32
    %27 = tpu.dynamic_rotate %0 by %c241_i32 dim 1 : vector<8x256xf32>, i32 -> vector<8x256xf32>
    %c6 = arith.constant 6 : index
    %c0_14 = arith.constant 0 : index
    %28 = vector.load %arg4[%c6, %c0_14] : memref<9x256xf32, #tpu.memory_space<vmem>>, vector<1x256xf32>
    %29 = vector.broadcast %28 : vector<1x256xf32> to vector<8x256xf32>
    %30 = arith.mulf %27, %29 : vector<8x256xf32>
    %c48 = arith.constant 48 : index
    %c0_15 = arith.constant 0 : index
    %31 = vector.load %arg6[%c48, %c0_15] : memref<72x256xf32, #tpu.memory_space<vmem>>, vector<8x256xf32>
    tpu.vector_store %arg6[%c48, %c0_15], %30 {strides = array<i32>} : memref<72x256xf32, #tpu.memory_space<vmem>>, vector<8x256xf32>,
    %c240_i32 = arith.constant 240 : i32
    %32 = tpu.dynamic_rotate %0 by %c240_i32 dim 1 : vector<8x256xf32>, i32 -> vector<8x256xf32>
    %c7 = arith.constant 7 : index
    %c0_16 = arith.constant 0 : index
    %33 = vector.load %arg4[%c7, %c0_16] : memref<9x256xf32, #tpu.memory_space<vmem>>, vector<1x256xf32>
    %34 = vector.broadcast %33 : vector<1x256xf32> to vector<8x256xf32>
    %35 = arith.mulf %32, %34 : vector<8x256xf32>
    %c56 = arith.constant 56 : index
    %c0_17 = arith.constant 0 : index
    %36 = vector.load %arg6[%c56, %c0_17] : memref<72x256xf32, #tpu.memory_space<vmem>>, vector<8x256xf32>
    tpu.vector_store %arg6[%c56, %c0_17], %35 {strides = array<i32>} : memref<72x256xf32, #tpu.memory_space<vmem>>, vector<8x256xf32>,
    %c239_i32 = arith.constant 239 : i32
    %37 = tpu.dynamic_rotate %0 by %c239_i32 dim 1 : vector<8x256xf32>, i32 -> vector<8x256xf32>
    %c8_18 = arith.constant 8 : index
    %c0_19 = arith.constant 0 : index
    %38 = vector.load %arg4[%c8_18, %c0_19] : memref<9x256xf32, #tpu.memory_space<vmem>>, vector<1x256xf32>
    %39 = vector.broadcast %38 : vector<1x256xf32> to vector<8x256xf32>
    %40 = arith.mulf %37, %39 : vector<8x256xf32>
    %c64 = arith.constant 64 : index
    %c0_20 = arith.constant 0 : index
    %41 = vector.load %arg6[%c64, %c0_20] : memref<72x256xf32, #tpu.memory_space<vmem>>, vector<8x256xf32>
    tpu.vector_store %arg6[%c64, %c0_20], %40 {strides = array<i32>} : memref<72x256xf32, #tpu.memory_space<vmem>>, vector<8x256xf32>,
    %c0_21 = arith.constant 0 : index
    %c0_22 = arith.constant 0 : index
    %c0_23 = arith.constant 0 : index
    %42 = vector.load %arg2[%c0_21, %c0_22, %c0_23] : memref<2x8x72xf32, #tpu.memory_space<vmem>>, vector<1x8x72xf32>
    %43 = vector.shape_cast %42 : vector<1x8x72xf32> to vector<8x72xf32>
    %c0_24 = arith.constant 0 : index
    %c0_25 = arith.constant 0 : index
    %44 = vector.load %arg6[%c0_24, %c0_25] : memref<72x256xf32, #tpu.memory_space<vmem>>, vector<72x256xf32>
    %cst = arith.constant dense<0.000000e+00> : vector<8x256xf32>
    %45 = tpu.matmul %43, %44, %cst {dimension_numbers = #tpu.dot_dimension_numbers<[1], [0], [0], [1], [0, 0, 1, 1], [], []>} : vector<8x72xf32>, vector<72x256xf32>, vector<8x256xf32> -> vector<8x256xf32>
    %c0_26 = arith.constant 0 : index
    %c0_27 = arith.constant 0 : index
    %c0_28 = arith.constant 0 : index
    %46 = vector.load %arg3[%c0_26, %c0_27, %c0_28] : memref<2x8x1xf32, #tpu.memory_space<vmem>>, vector<1x8x1xf32>
    %47 = vector.shape_cast %46 : vector<1x8x1xf32> to vector<8x1xf32>
    %48 = vector.broadcast %47 : vector<8x1xf32> to vector<8x256xf32>
    %49 = arith.addf %45, %48 : vector<8x256xf32>
    %cst_29 = arith.constant 0.000000e+00 : f32
    %50 = vector.broadcast %cst_29 : f32 to vector<8x256xf32>
    %51 = arith.cmpf ogt, %49, %50 : vector<8x256xf32>
    %cst_30 = arith.constant 0.00999999977 : f32
    %52 = vector.broadcast %cst_30 : f32 to vector<8x256xf32>
    %53 = arith.mulf %52, %49 : vector<8x256xf32>
    %54 = arith.select %51, %49, %53 : vector<8x256xi1>, vector<8x256xf32>
    %c17_i32_31 = arith.constant 17 : i32
    %55 = tpu.dynamic_rotate %54 by %c17_i32_31 dim 1 : vector<8x256xf32>, i32 -> vector<8x256xf32>
    %c0_32 = arith.constant 0 : index
    %c0_33 = arith.constant 0 : index
    %56 = vector.load %arg4[%c0_32, %c0_33] : memref<9x256xf32, #tpu.memory_space<vmem>>, vector<1x256xf32>
    %57 = vector.broadcast %56 : vector<1x256xf32> to vector<8x256xf32>
    %58 = arith.mulf %55, %57 : vector<8x256xf32>
    %c0_34 = arith.constant 0 : index
    %c0_35 = arith.constant 0 : index
    %59 = vector.load %arg6[%c0_34, %c0_35] : memref<72x256xf32, #tpu.memory_space<vmem>>, vector<8x256xf32>
    tpu.vector_store %arg6[%c0_34, %c0_35], %58 {strides = array<i32>} : memref<72x256xf32, #tpu.memory_space<vmem>>, vector<8x256xf32>,
    %c16_i32_36 = arith.constant 16 : i32
    %60 = tpu.dynamic_rotate %54 by %c16_i32_36 dim 1 : vector<8x256xf32>, i32 -> vector<8x256xf32>
    %c1_37 = arith.constant 1 : index
    %c0_38 = arith.constant 0 : index
    %61 = vector.load %arg4[%c1_37, %c0_38] : memref<9x256xf32, #tpu.memory_space<vmem>>, vector<1x256xf32>
    %62 = vector.broadcast %61 : vector<1x256xf32> to vector<8x256xf32>
    %63 = arith.mulf %60, %62 : vector<8x256xf32>
    %c8_39 = arith.constant 8 : index
    %c0_40 = arith.constant 0 : index
    %64 = vector.load %arg6[%c8_39, %c0_40] : memref<72x256xf32, #tpu.memory_space<vmem>>, vector<8x256xf32>
    tpu.vector_store %arg6[%c8_39, %c0_40], %63 {strides = array<i32>} : memref<72x256xf32, #tpu.memory_space<vmem>>, vector<8x256xf32>,
    %c15_i32_41 = arith.constant 15 : i32
    %65 = tpu.dynamic_rotate %54 by %c15_i32_41 dim 1 : vector<8x256xf32>, i32 -> vector<8x256xf32>
    %c2_42 = arith.constant 2 : index
    %c0_43 = arith.constant 0 : index
    %66 = vector.load %arg4[%c2_42, %c0_43] : memref<9x256xf32, #tpu.memory_space<vmem>>, vector<1x256xf32>
    %67 = vector.broadcast %66 : vector<1x256xf32> to vector<8x256xf32>
    %68 = arith.mulf %65, %67 : vector<8x256xf32>
    %c16_44 = arith.constant 16 : index
    %c0_45 = arith.constant 0 : index
    %69 = vector.load %arg6[%c16_44, %c0_45] : memref<72x256xf32, #tpu.memory_space<vmem>>, vector<8x256xf32>
    tpu.vector_store %arg6[%c16_44, %c0_45], %68 {strides = array<i32>} : memref<72x256xf32, #tpu.memory_space<vmem>>, vector<8x256xf32>,
    %c1_i32_46 = arith.constant 1 : i32
    %70 = tpu.dynamic_rotate %54 by %c1_i32_46 dim 1 : vector<8x256xf32>, i32 -> vector<8x256xf32>
    %c3_47 = arith.constant 3 : index
    %c0_48 = arith.constant 0 : index
    %71 = vector.load %arg4[%c3_47, %c0_48] : memref<9x256xf32, #tpu.memory_space<vmem>>, vector<1x256xf32>
    %72 = vector.broadcast %71 : vector<1x256xf32> to vector<8x256xf32>
    %73 = arith.mulf %70, %72 : vector<8x256xf32>
    %c24_49 = arith.constant 24 : index
    %c0_50 = arith.constant 0 : index
    %74 = vector.load %arg6[%c24_49, %c0_50] : memref<72x256xf32, #tpu.memory_space<vmem>>, vector<8x256xf32>
    tpu.vector_store %arg6[%c24_49, %c0_50], %73 {strides = array<i32>} : memref<72x256xf32, #tpu.memory_space<vmem>>, vector<8x256xf32>,
    %c32_51 = arith.constant 32 : index
    %c0_52 = arith.constant 0 : index
    %75 = vector.load %arg6[%c32_51, %c0_52] : memref<72x256xf32, #tpu.memory_space<vmem>>, vector<8x256xf32>
    tpu.vector_store %arg6[%c32_51, %c0_52], %54 {strides = array<i32>} : memref<72x256xf32, #tpu.memory_space<vmem>>, vector<8x256xf32>,
    %c255_i32_53 = arith.constant 255 : i32
    %76 = tpu.dynamic_rotate %54 by %c255_i32_53 dim 1 : vector<8x256xf32>, i32 -> vector<8x256xf32>
    %c5_54 = arith.constant 5 : index
    %c0_55 = arith.constant 0 : index
    %77 = vector.load %arg4[%c5_54, %c0_55] : memref<9x256xf32, #tpu.memory_space<vmem>>, vector<1x256xf32>
    %78 = vector.broadcast %77 : vector<1x256xf32> to vector<8x256xf32>
    %79 = arith.mulf %76, %78 : vector<8x256xf32>
    %c40_56 = arith.constant 40 : index
    %c0_57 = arith.constant 0 : index
    %80 = vector.load %arg6[%c40_56, %c0_57] : memref<72x256xf32, #tpu.memory_space<vmem>>, vector<8x256xf32>
    tpu.vector_store %arg6[%c40_56, %c0_57], %79 {strides = array<i32>} : memref<72x256xf32, #tpu.memory_space<vmem>>, vector<8x256xf32>,
    %c241_i32_58 = arith.constant 241 : i32
    %81 = tpu.dynamic_rotate %54 by %c241_i32_58 dim 1 : vector<8x256xf32>, i32 -> vector<8x256xf32>
    %c6_59 = arith.constant 6 : index
    %c0_60 = arith.constant 0 : index
    %82 = vector.load %arg4[%c6_59, %c0_60] : memref<9x256xf32, #tpu.memory_space<vmem>>, vector<1x256xf32>
    %83 = vector.broadcast %82 : vector<1x256xf32> to vector<8x256xf32>
    %84 = arith.mulf %81, %83 : vector<8x256xf32>
    %c48_61 = arith.constant 48 : index
    %c0_62 = arith.constant 0 : index
    %85 = vector.load %arg6[%c48_61, %c0_62] : memref<72x256xf32, #tpu.memory_space<vmem>>, vector<8x256xf32>
    tpu.vector_store %arg6[%c48_61, %c0_62], %84 {strides = array<i32>} : memref<72x256xf32, #tpu.memory_space<vmem>>, vector<8x256xf32>,
    %c240_i32_63 = arith.constant 240 : i32
    %86 = tpu.dynamic_rotate %54 by %c240_i32_63 dim 1 : vector<8x256xf32>, i32 -> vector<8x256xf32>
    %c7_64 = arith.constant 7 : index
    %c0_65 = arith.constant 0 : index
    %87 = vector.load %arg4[%c7_64, %c0_65] : memref<9x256xf32, #tpu.memory_space<vmem>>, vector<1x256xf32>
    %88 = vector.broadcast %87 : vector<1x256xf32> to vector<8x256xf32>
    %89 = arith.mulf %86, %88 : vector<8x256xf32>
    %c56_66 = arith.constant 56 : index
    %c0_67 = arith.constant 0 : index
    %90 = vector.load %arg6[%c56_66, %c0_67] : memref<72x256xf32, #tpu.memory_space<vmem>>, vector<8x256xf32>
    tpu.vector_store %arg6[%c56_66, %c0_67], %89 {strides = array<i32>} : memref<72x256xf32, #tpu.memory_space<vmem>>, vector<8x256xf32>,
    %c239_i32_68 = arith.constant 239 : i32
    %91 = tpu.dynamic_rotate %54 by %c239_i32_68 dim 1 : vector<8x256xf32>, i32 -> vector<8x256xf32>
    %c8_69 = arith.constant 8 : index
    %c0_70 = arith.constant 0 : index
    %92 = vector.load %arg4[%c8_69, %c0_70] : memref<9x256xf32, #tpu.memory_space<vmem>>, vector<1x256xf32>
    %93 = vector.broadcast %92 : vector<1x256xf32> to vector<8x256xf32>
    %94 = arith.mulf %91, %93 : vector<8x256xf32>
    %c64_71 = arith.constant 64 : index
    %c0_72 = arith.constant 0 : index
    %95 = vector.load %arg6[%c64_71, %c0_72] : memref<72x256xf32, #tpu.memory_space<vmem>>, vector<8x256xf32>
    tpu.vector_store %arg6[%c64_71, %c0_72], %94 {strides = array<i32>} : memref<72x256xf32, #tpu.memory_space<vmem>>, vector<8x256xf32>,
    %c1_73 = arith.constant 1 : index
    %c0_74 = arith.constant 0 : index
    %c0_75 = arith.constant 0 : index
    %96 = vector.load %arg2[%c1_73, %c0_74, %c0_75] : memref<2x8x72xf32, #tpu.memory_space<vmem>>, vector<1x8x72xf32>
    %97 = vector.shape_cast %96 : vector<1x8x72xf32> to vector<8x72xf32>
    %c0_76 = arith.constant 0 : index
    %c0_77 = arith.constant 0 : index
    %98 = vector.load %arg6[%c0_76, %c0_77] : memref<72x256xf32, #tpu.memory_space<vmem>>, vector<72x256xf32>
    %cst_78 = arith.constant dense<0.000000e+00> : vector<8x256xf32>
    %99 = tpu.matmul %97, %98, %cst_78 {dimension_numbers = #tpu.dot_dimension_numbers<[1], [0], [0], [1], [0, 0, 1, 1], [], []>} : vector<8x72xf32>, vector<72x256xf32>, vector<8x256xf32> -> vector<8x256xf32>
    %c1_79 = arith.constant 1 : index
    %c0_80 = arith.constant 0 : index
    %c0_81 = arith.constant 0 : index
    %100 = vector.load %arg3[%c1_79, %c0_80, %c0_81] : memref<2x8x1xf32, #tpu.memory_space<vmem>>, vector<1x8x1xf32>
    %101 = vector.shape_cast %100 : vector<1x8x1xf32> to vector<8x1xf32>
    %102 = vector.broadcast %101 : vector<8x1xf32> to vector<8x256xf32>
    %103 = arith.addf %99, %102 : vector<8x256xf32>
    %cst_82 = arith.constant 0.000000e+00 : f32
    %104 = vector.broadcast %cst_82 : f32 to vector<8x256xf32>
    %105 = arith.cmpf ogt, %103, %104 : vector<8x256xf32>
    %cst_83 = arith.constant 0.00999999977 : f32
    %106 = vector.broadcast %cst_83 : f32 to vector<8x256xf32>
    %107 = arith.mulf %106, %103 : vector<8x256xf32>
    %108 = arith.select %105, %103, %107 : vector<8x256xi1>, vector<8x256xf32>
    %c0_84 = arith.constant 0 : index
    %c0_85 = arith.constant 0 : index
    %109 = vector.load %arg5[%c0_84, %c0_85] : memref<8x256xf32, #tpu.memory_space<vmem>>, vector<8x256xf32>
    tpu.vector_store %arg5[%c0_84, %c0_85], %108 {strides = array<i32>} : memref<8x256xf32, #tpu.memory_space<vmem>>, vector<8x256xf32>,
    return
  }
  func.func @transform_0(%arg0: i32) -> (i32, i32) {
    %c0_i32 = arith.constant 0 : i32
    %c0_i32_0 = arith.constant 0 : i32
    return %c0_i32, %arg0 : i32, i32
  }
  func.func @transform_1(%arg0: i32) -> (i32, i32, i32) {
    %c0_i32 = arith.constant 0 : i32
    %c0_i32_0 = arith.constant 0 : i32
    %c0_i32_1 = arith.constant 0 : i32
    %c0_i32_2 = arith.constant 0 : i32
    return %c0_i32, %c0_i32_0, %c0_i32_1 : i32, i32, i32
  }
  func.func @transform_2(%arg0: i32) -> (i32, i32, i32) {
    %c0_i32 = arith.constant 0 : i32
    %c0_i32_0 = arith.constant 0 : i32
    %c0_i32_1 = arith.constant 0 : i32
    %c0_i32_2 = arith.constant 0 : i32
    return %c0_i32, %c0_i32_0, %c0_i32_1 : i32, i32, i32
  }
  func.func @transform_3(%arg0: i32) -> (i32, i32) {
    %c0_i32 = arith.constant 0 : i32
    %c0_i32_0 = arith.constant 0 : i32
    %c0_i32_1 = arith.constant 0 : i32
    return %c0_i32, %c0_i32_0 : i32, i32
  }
  func.func @transform_4(%arg0: i32) -> (i32, i32) {
    %c0_i32 = arith.constant 0 : i32
    %c0_i32_0 = arith.constant 0 : i32
    return %c0_i32, %arg0 : i32, i32
  }
}

</mosaic_0001>

<llo_original>
// kernel: conv2dblock_forward.1
$region0: #{conv2dblock_forward.1}
  #allocation0 [shape = 'u32[]', space=smem, size = 0x4, offset = 0x4, fixed_abs, tag = 'smem constant byte address 0x4 - core index']
  #allocation1 [shape = 'u32[72,128]{1,0:T(1,128)}', space=vmem, size = 0x9000, scoped, tag = 'internal scratch']
  #allocation2 [shape = 'f32[72,256]{1,0:T(8,128)}', space=vmem, size = 0x12000, scoped, tag = 'scratch operand']
  %s0 = inlined_call_operand.vmem [shape: f32[8,512], index: 0, kind: input, shape index: {}]
  %s1 = inlined_call_operand.vmem [shape: f32[2,8,72], index: 1, kind: input, shape index: {}]
  %s2 = inlined_call_operand.vmem [shape: f32[2,8,1], index: 2, kind: input, shape index: {}]
  %s3 = inlined_call_operand.vmem [shape: f32[9,256], index: 3, kind: input, shape index: {}]
  %s4 = inlined_call_operand.vmem [shape: f32[8,512], index: 4, kind: output, shape index: {}]
  %s5 = sld [smem:[#allocation0]]
  $region49: #{conv2dblock_forward.1} parent=0
    _
  %s7 = ssub.s32 1, %s5
  %s8 = scalar_select 0, %s7, %s5
  loop: start=0, step=1, limit=4
  $region2: #{conv2dblock_forward.1} parent=0 // loop_pre_header
    _
  $region3: #{conv2dblock_forward.1} parent=0 // loop_header
    %s10 = sphi 0, %s14
    %p11 = scmp.ge.s32.totalorder %s10, 4
    %s20 = sphi 0, %s22
    %s23 = sphi 0, %s20
    %s24 = sphi 0, %s23
    %s40 = sphi 0, %s24
    %s44 = sphi 0, %s44
    %s46 = sphi 0, %s44
    %s47 = sphi 0, %s46
    %s61 = sphi 0, %s47
    %s65 = sphi 0, %s65
    %s67 = sphi 0, %s65
    %s68 = sphi 0, %s67
    %s82 = sphi 0, %s68
    %s86 = sphi 0, %s86
    %s88 = sphi 0, %s86
    %s89 = sphi 0, %s88
    %s103 = sphi 0, %s89
    %s109 = sphi 0, %s111
    %s112 = sphi 0, %s109
    %s113 = sphi 0, %s112
    %s129 = sphi 0, %s113
  $region4: #{conv2dblock_forward.1} parent=0 // loop_header_branch
    %13 = sbr.rel (%p11) target = $region8
  $region5: #{conv2dblock_forward.1} parent=0 // loop_body
    %s15 = ssub.s32 %s10, 1
    %s16 = ssub.s32 %s10, 2
    %s17 = sadd.s32 %s10, 1
    %s18 = ssub.s32 %s10, %s17
    %p19 = scmp.eq.s32.totalorder %s18, 0
    %s21 = sadd.s32 %s20, 1
    %s22 = scalar_select %p19, %s20, %s21
    %p25 = pneg %p19
    %p26 = scmp.eq.s32.totalorder %s10, 1
    %p27 = por %p25, %p26
    %p28 = scmp.ne.s32.totalorder %s20, %s23
    %p29 = scmp.eq.s32.totalorder %s10, 0
    %p30 = por %p28, %p29
    %p31 = scmp.ne.s32.totalorder %s20, %s23
    %p32 = scmp.eq.s32.totalorder %s15, 1
    %p33 = por %p31, %p32
    %p34 = scmp.ne.s32.totalorder %s23, %s24
    %p35 = scmp.eq.s32.totalorder %s15, 0
    %p36 = por %p34, %p35
    %p37 = scmp.ne.s32.totalorder %s23, %s24
    %p38 = scmp.eq.s32.totalorder %s16, 1
    %p39 = por %p37, %p38
    %p41 = scmp.ne.s32.totalorder %s24, %s40
    %p42 = scmp.eq.s32.totalorder %s16, 0
    %p43 = por %p41, %p42
    %s45 = sadd.s32 %s44, 1
    %p48 = scmp.eq.s32.totalorder %s10, 1
    %p49 = scmp.ne.s32.totalorder %s44, %s46
    %p50 = scmp.eq.s32.totalorder %s10, 0
    %p51 = por %p49, %p50
    %p52 = scmp.ne.s32.totalorder %s44, %s46
    %p53 = scmp.eq.s32.totalorder %s15, 1
    %p54 = por %p52, %p53
    %p55 = scmp.ne.s32.totalorder %s46, %s47
    %p56 = scmp.eq.s32.totalorder %s15, 0
    %p57 = por %p55, %p56
    %p58 = scmp.ne.s32.totalorder %s46, %s47
    %p59 = scmp.eq.s32.totalorder %s16, 1
    %p60 = por %p58, %p59
    %p62 = scmp.ne.s32.totalorder %s47, %s61
    %p63 = scmp.eq.s32.totalorder %s16, 0
    %p64 = por %p62, %p63
    %s66 = sadd.s32 %s65, 1
    %p69 = scmp.eq.s32.totalorder %s10, 1
    %p70 = scmp.ne.s32.totalorder %s65, %s67
    %p71 = scmp.eq.s32.totalorder %s10, 0
    %p72 = por %p70, %p71
    %p73 = scmp.ne.s32.totalorder %s65, %s67
    %p74 = scmp.eq.s32.totalorder %s15, 1
    %p75 = por %p73, %p74
    %p76 = scmp.ne.s32.totalorder %s67, %s68
    %p77 = scmp.eq.s32.totalorder %s15, 0
    %p78 = por %p76, %p77
    %p79 = scmp.ne.s32.totalorder %s67, %s68
    %p80 = scmp.eq.s32.totalorder %s16, 1
    %p81 = por %p79, %p80
    %p83 = scmp.ne.s32.totalorder %s68, %s82
    %p84 = scmp.eq.s32.totalorder %s16, 0
    %p85 = por %p83, %p84
    %s87 = sadd.s32 %s86, 1
    %p90 = scmp.eq.s32.totalorder %s10, 1
    %p91 = scmp.ne.s32.totalorder %s86, %s88
    %p92 = scmp.eq.s32.totalorder %s10, 0
    %p93 = por %p91, %p92
    %p94 = scmp.ne.s32.totalorder %s86, %s88
    %p95 = scmp.eq.s32.totalorder %s15, 1
    %p96 = por %p94, %p95
    %p97 = scmp.ne.s32.totalorder %s88, %s89
    %p98 = scmp.eq.s32.totalorder %s15, 0
    %p99 = por %p97, %p98
    %p100 = scmp.ne.s32.totalorder %s88, %s89
    %p101 = scmp.eq.s32.totalorder %s16, 1
    %p102 = por %p100, %p101
    %p104 = scmp.ne.s32.totalorder %s89, %s103
    %p105 = scmp.eq.s32.totalorder %s16, 0
    %p106 = por %p104, %p105
    %s107 = ssub.s32 %s10, %s17
    %p108 = scmp.eq.s32.totalorder %s107, 0
    %s110 = sadd.s32 %s109, 1
    %s111 = scalar_select %p108, %s109, %s110
    %p114 = pneg %p108
    %p115 = scmp.eq.s32.totalorder %s10, 1
    %p116 = por %p114, %p115
    %p117 = scmp.ne.s32.totalorder %s109, %s112
    %p118 = scmp.eq.s32.totalorder %s10, 0
    %p119 = por %p117, %p118
    %p120 = scmp.ne.s32.totalorder %s109, %s112
    %p121 = scmp.eq.s32.totalorder %s15, 1
    %p122 = por %p120, %p121
    %p123 = scmp.ne.s32.totalorder %s112, %s113
    %p124 = scmp.eq.s32.totalorder %s15, 0
    %p125 = por %p123, %p124
    %p126 = scmp.ne.s32.totalorder %s112, %s113
    %p127 = scmp.eq.s32.totalorder %s16, 1
    %p128 = por %p126, %p127
    %p130 = scmp.ne.s32.totalorder %s113, %s129
    %p131 = scmp.eq.s32.totalorder %s16, 0
    %p132 = por %p130, %p131
    %p133 = scmp.le.s32.totalorder 1, %s10
    %p134 = scmp.lt.s32.totalorder %s10, 3
    %p135 = pnand %p133, %p134
    %p136 = pneg %p135
    // Predicated region
    $region9: #{conv2dblock_forward.1} parent=5 // pred_check
      _
    $region10: #{conv2dblock_forward.1} parent=5 // pred_check_branch
      %138 = sbr.rel (%p135) target = $region12
    $region11: #{conv2dblock_forward.1} parent=5 // pred_region
      %s139 = ssub.s32 %s10, 1
      // Predicated region
      $region13: #{conv2dblock_forward.1} parent=11 // pred_check
        %p140 = pneg %p57
      $region14: #{conv2dblock_forward.1} parent=11 // pred_check_branch
        %142 = sbr.rel (%p140) target = $region16
      $region15: #{conv2dblock_forward.1} parent=11 // pred_region
        _
      $region16: #{conv2dblock_forward.1} parent=11 // pred_fallthru
        _
      // Predicated region
      $region17: #{conv2dblock_forward.1} parent=11 // pred_check
        %p143 = pneg %p78
      $region18: #{conv2dblock_forward.1} parent=11 // pred_check_branch
        %145 = sbr.rel (%p143) target = $region20
      $region19: #{conv2dblock_forward.1} parent=11 // pred_region
        _
      $region20: #{conv2dblock_forward.1} parent=11 // pred_fallthru
        _
      // Predicated region
      $region21: #{conv2dblock_forward.1} parent=11 // pred_check
        %p146 = pneg %p99
      $region22: #{conv2dblock_forward.1} parent=11 // pred_check_branch
        %148 = sbr.rel (%p146) target = $region24
      $region23: #{conv2dblock_forward.1} parent=11 // pred_region
        _
      $region24: #{conv2dblock_forward.1} parent=11 // pred_fallthru
        _
    $region12: #{conv2dblock_forward.1} parent=5 // pred_fallthru
      _
    %p149 = scmp.lt.s32.totalorder %s10, 2
    // Predicated region
    $region25: #{conv2dblock_forward.1} parent=5 // pred_check
      %p150 = pneg %p149
    $region26: #{conv2dblock_forward.1} parent=5 // pred_check_branch
      %152 = sbr.rel (%p150) target = $region28
    $region27: #{conv2dblock_forward.1} parent=5 // pred_region
      // Predicated region
      $region29: #{conv2dblock_forward.1} parent=27 // pred_check
        %p153 = pneg %p30
      $region30: #{conv2dblock_forward.1} parent=27 // pred_check_branch
        %155 = sbr.rel (%p153) target = $region32
      $region31: #{conv2dblock_forward.1} parent=27 // pred_region
        %s156 = smul.u32 2, %s10
        %p157 = scmp.lt.s32.totalorder %s156, 3
        %s158 = scalar_select %p157, %s156, 3
        %s159 = smul.addr %s158, 8
        %s160 = scalar_lea.vmem %s0, %s159
        %s161 = smul.u32 2, %s10
      $region32: #{conv2dblock_forward.1} parent=27 // pred_fallthru
        _
    $region28: #{conv2dblock_forward.1} parent=5 // pred_fallthru
      _
    %p162 = scmp.le.s32.totalorder 1, %s10
    %p163 = scmp.lt.s32.totalorder %s10, 3
    %p164 = pnand %p162, %p163
    %p165 = pneg %p164
    // Predicated region
    $region33: #{conv2dblock_forward.1} parent=5 // pred_check
      _
    $region34: #{conv2dblock_forward.1} parent=5 // pred_check_branch
      %167 = sbr.rel (%p164) target = $region36
    $region35: #{conv2dblock_forward.1} parent=5 // pred_region
      %s168 = ssub.s32 %s10, 1
      %s169 = smul.u32 2, %s15
      %p170 = scmp.lt.s32.totalorder %s169, 3
      %s171 = scalar_select %p170, %s169, 3
      %s172 = smul.addr %s171, 8
      %s173 = scalar_lea.vmem %s0, %s172
      %p174 = pneg %p36
      %p175 = pneg %p33
      %p176 = pneg %p57
      %p177 = pneg %p54
      %p178 = pneg %p78
      %p179 = pneg %p75
      %p180 = pneg %p99
      %p181 = pneg %p96
      %p182 = pneg %p125
      %p183 = pneg %p122
      %s184 = smul.u32 2, %s15
      %p185 = scmp.lt.s32.totalorder %s184, 3
      %s186 = scalar_select %p185, %s184, 3
      %s187 = smul.addr %s186, 8
      %s188 = scalar_lea.vmem %s4, %s187
      %s189 = smul.u32 2, %s15
      %p190 = scmp.lt.s32.totalorder %s189, 3
      %s191 = scalar_select %p190, %s189, 3
      %s192 = smul.addr %s191, 8
      %s193 = scalar_lea.vmem %s0, %s192
      %s194 = smul.u32 2, %s15
      %s195 = smul.u32 2, %s15
      %p196 = scmp.lt.s32.totalorder %s195, 3
      %s197 = scalar_select %p196, %s195, 3
      %s198 = smul.addr %s197, 8
      %s199 = scalar_lea.vmem %s4, %s198
      %s200 = smul.u32 2, %s15
      %v201 = vld [vmem:[%s193] sm:$0xff]
      %v202 = vld [vmem:[%s193 + $0x8] sm:$0xff]
      %203 = vrot.lane.b32.xlu0 %v201, 17
      %v204 = vpop.permute.xlu0 %203
      %205 = vrot.lane.b32.xlu0 %v202, 17
      %v206 = vpop.permute.xlu0 %205
      %v207 = vlaneseq
      %v208 = vand.u32 %v207, 127
      %vm209 = vcmp.lt.s32.totalorder %v208, 17
      %v210 = vsel %vm209, %v204, %v206
      %v211 = vsel %vm209, %v206, %v204
      %v212 = vld [vmem:[%s3] ss:$8 sm:$0x3]
      %v214 = vperm.slane %v212, 0
      %v215 = vperm.slane %v212, 1
      %v218 = vmul.f32 %v211, %v214
      %v219 = vmul.f32 %v210, %v215
      %220 = vst [vmem:[#allocation2] sm:$0xff] %v218
      %221 = vst [vmem:[#allocation2 + $0x8] sm:$0xff] %v219
      %222 = vrot.lane.b32.xlu0 %v201, 16
      %v223 = vpop.permute.xlu0 %222
      %224 = vrot.lane.b32.xlu0 %v202, 16
      %v225 = vpop.permute.xlu0 %224
      %vm226 = vcmp.lt.s32.totalorder %v208, 16
      %v227 = vsel %vm226, %v223, %v225
      %v228 = vsel %vm226, %v225, %v223
      %s229 = scalar_lea.vmem %s3, 1
      %v230 = vld [vmem:[%s229] ss:$8 sm:$0x3]
      %v232 = vperm.slane %v230, 0
      %v233 = vperm.slane %v230, 1
      %v236 = vmul.f32 %v228, %v232
      %v237 = vmul.f32 %v227, %v233
      %238 = vst [vmem:[#allocation2 + $0x10] sm:$0xff] %v236
      %239 = vst [vmem:[#allocation2 + $0x18] sm:$0xff] %v237
      %240 = vrot.lane.b32.xlu0 %v201, 15
      %v241 = vpop.permute.xlu0 %240
      %242 = vrot.lane.b32.xlu0 %v202, 15
      %v243 = vpop.permute.xlu0 %242
      %vm244 = vcmp.lt.s32.totalorder %v208, 15
      %v245 = vsel %vm244, %v241, %v243
      %v246 = vsel %vm244, %v243, %v241
      %s247 = scalar_lea.vmem %s3, 2
      %v248 = vld [vmem:[%s247] ss:$8 sm:$0x3]
      %v250 = vperm.slane %v248, 0
      %v251 = vperm.slane %v248, 1
      %v254 = vmul.f32 %v246, %v250
      %v255 = vmul.f32 %v245, %v251
      %256 = vst [vmem:[#allocation2 + $0x20] sm:$0xff] %v254
      %257 = vst [vmem:[#allocation2 + $0x28] sm:$0xff] %v255
      %258 = vrot.lane.b32.xlu0 %v201, 1
      %v259 = vpop.permute.xlu0 %258
      %260 = vrot.lane.b32.xlu0 %v202, 1
      %v261 = vpop.permute.xlu0 %260
      %vm262 = vcmp.lt.s32.totalorder %v208, 1
      %v263 = vsel %vm262, %v259, %v261
      %v264 = vsel %vm262, %v261, %v259
      %s265 = scalar_lea.vmem %s3, 3
      %v266 = vld [vmem:[%s265] ss:$8 sm:$0x3]
      %v268 = vperm.slane %v266, 0
      %v269 = vperm.slane %v266, 1
      %v272 = vmul.f32 %v264, %v268
      %v273 = vmul.f32 %v263, %v269
      %274 = vst [vmem:[#allocation2 + $0x30] sm:$0xff] %v272
      %275 = vst [vmem:[#allocation2 + $0x38] sm:$0xff] %v273
      %276 = vst [vmem:[#allocation2 + $0x40] sm:$0xff] %v201
      %277 = vst [vmem:[#allocation2 + $0x48] sm:$0xff] %v202
      %278 = vrot.lane.b32.xlu0 %v201, 127
      %v279 = vpop.permute.xlu0 %278
      %280 = vrot.lane.b32.xlu0 %v202, 127
      %v281 = vpop.permute.xlu0 %280
      %vm282 = vcmp.lt.s32.totalorder %v208, 127
      %v283 = vsel %vm282, %v279, %v281
      %v284 = vsel %vm282, %v281, %v279
      %s285 = scalar_lea.vmem %s3, 5
      %v286 = vld [vmem:[%s285] ss:$8 sm:$0x3]
      %v288 = vperm.slane %v286, 0
      %v289 = vperm.slane %v286, 1
      %v292 = vmul.f32 %v283, %v288
      %v293 = vmul.f32 %v284, %v289
      %294 = vst [vmem:[#allocation2 + $0x50] sm:$0xff] %v292
      %295 = vst [vmem:[#allocation2 + $0x58] sm:$0xff] %v293
      %296 = vrot.lane.b32.xlu0 %v201, 113
      %v297 = vpop.permute.xlu0 %296
      %298 = vrot.lane.b32.xlu0 %v202, 113
      %v299 = vpop.permute.xlu0 %298
      %vm300 = vcmp.lt.s32.totalorder %v208, 113
      %v301 = vsel %vm300, %v297, %v299
      %v302 = vsel %vm300, %v299, %v297
      %s303 = scalar_lea.vmem %s3, 6
      %v304 = vld [vmem:[%s303] ss:$8 sm:$0x3]
      %v306 = vperm.slane %v304, 0
      %v307 = vperm.slane %v304, 1
      %v310 = vmul.f32 %v301, %v306
      %v311 = vmul.f32 %v302, %v307
      %312 = vst [vmem:[#allocation2 + $0x60] sm:$0xff] %v310
      %313 = vst [vmem:[#allocation2 + $0x68] sm:$0xff] %v311
      %314 = vrot.lane.b32.xlu0 %v201, 112
      %v315 = vpop.permute.xlu0 %314
      %316 = vrot.lane.b32.xlu0 %v202, 112
      %v317 = vpop.permute.xlu0 %316
      %vm318 = vcmp.lt.s32.totalorder %v208, 112
      %v319 = vsel %vm318, %v315, %v317
      %v320 = vsel %vm318, %v317, %v315
      %s321 = scalar_lea.vmem %s3, 7
      %v322 = vld [vmem:[%s321] ss:$8 sm:$0x3]
      %v324 = vperm.slane %v322, 0
      %v325 = vperm.slane %v322, 1
      %v328 = vmul.f32 %v319, %v324
      %v329 = vmul.f32 %v320, %v325
      %330 = vst [vmem:[#allocation2 + $0x70] sm:$0xff] %v328
      %331 = vst [vmem:[#allocation2 + $0x78] sm:$0xff] %v329
      %332 = vrot.lane.b32.xlu0 %v201, 111
      %v333 = vpop.permute.xlu0 %332
      %334 = vrot.lane.b32.xlu0 %v202, 111
      %v335 = vpop.permute.xlu0 %334
      %vm336 = vcmp.lt.s32.totalorder %v208, 111
      %v337 = vsel %vm336, %v333, %v335
      %v338 = vsel %vm336, %v335, %v333
      %s339 = scalar_lea.vmem %s3, 16
      %v340 = vld [vmem:[%s339] ss:$8 sm:$0x3]
      %v342 = vperm.slane %v340, 0
      %v343 = vperm.slane %v340, 1
      %v346 = vmul.f32 %v337, %v342
      %v347 = vmul.f32 %v338, %v343
      %348 = vst [vmem:[#allocation2 + $0x80] sm:$0xff] %v346
      %349 = vst [vmem:[#allocation2 + $0x88] sm:$0xff] %v347
      %v350 = vld [vmem:[%s1] sm:$0xff]
      %v351 = vld [vmem:[#allocation2] sm:$0xff]
      %v352 = vld [vmem:[#allocation2 + $0x8] sm:$0xff]
      %v353 = vld [vmem:[#allocation2 + $0x10] sm:$0xff]
      %v354 = vld [vmem:[#allocation2 + $0x18] sm:$0xff]
      %v355 = vld [vmem:[#allocation2 + $0x20] sm:$0xff]
      %v356 = vld [vmem:[#allocation2 + $0x28] sm:$0xff]
      %v357 = vld [vmem:[#allocation2 + $0x30] sm:$0xff]
      %v358 = vld [vmem:[#allocation2 + $0x38] sm:$0xff]
      %v359 = vld [vmem:[#allocation2 + $0x40] sm:$0xff]
      %v360 = vld [vmem:[#allocation2 + $0x48] sm:$0xff]
      %v361 = vld [vmem:[#allocation2 + $0x50] sm:$0xff]
      %v362 = vld [vmem:[#allocation2 + $0x58] sm:$0xff]
      %v363 = vld [vmem:[#allocation2 + $0x60] sm:$0xff]
      %v364 = vld [vmem:[#allocation2 + $0x68] sm:$0xff]
      %v365 = vld [vmem:[#allocation2 + $0x70] sm:$0xff]
      %v366 = vld [vmem:[#allocation2 + $0x78] sm:$0xff]
      %v367 = vld [vmem:[#allocation2 + $0x80] sm:$0xff]
      %v368 = vld [vmem:[#allocation2 + $0x88] sm:$0xff]
      %v369 = vld [vmem:[%s2] sm:$0xff]
      %371 = vset.pattern.permute.xlu0 0
      %372 = vperm.xlu0 %371, %v369
      %v373 = vpop.permute.xlu0 %372
      %vm375 = vcmask 588800
      %v377 = vsel %vm375, %v350, 0
      %379 = vmatpush.msra.mxu0 0.0
      %380 = vmatpush.msra.mxu0 0.0
      %381 = vmatpush.msra.mxu0 0.0
      %382 = vmatpush.msra.mxu0 0.0
      %383 = vmatpush.msra.mxu0 0.0
      %384 = vmatpush.msra.mxu0 0.0
      %385 = vmatpush.msra.mxu0 0.0
      %386 = vmatpush.msra.mxu0 %v367
      %387 = vmatpush.msra.mxu0 %v365
      %388 = vmatpush.msra.mxu0 %v363
      %389 = vmatpush.msra.mxu0 %v361
      %390 = vmatpush.msra.mxu0 %v359
      %391 = vmatpush.msra.mxu0 %v357
      %392 = vmatpush.msra.mxu0 %v355
      %393 = vmatpush.msra.mxu0 %v353
      %394 = vmatpush.msra.mxu0 %v351
      %395 = vmatmul.f32.gmra.mxu0 %v377
      %v396 = vpop.f32.mrf.mxu0
      %v397 = vadd.f32 %v373, %v396
      %398 = vdwg.mxu0
      %399 = vmatpush.msra.mxu0 0.0
      %400 = vmatpush.msra.mxu0 0.0
      %401 = vmatpush.msra.mxu0 0.0
      %402 = vmatpush.msra.mxu0 0.0
      %403 = vmatpush.msra.mxu0 0.0
      %404 = vmatpush.msra.mxu0 0.0
      %405 = vmatpush.msra.mxu0 0.0
      %406 = vmatpush.msra.mxu0 %v368
      %407 = vmatpush.msra.mxu0 %v366
      %408 = vmatpush.msra.mxu0 %v364
      %409 = vmatpush.msra.mxu0 %v362
      %410 = vmatpush.msra.mxu0 %v360
      %411 = vmatpush.msra.mxu0 %v358
      %412 = vmatpush.msra.mxu0 %v356
      %413 = vmatpush.msra.mxu0 %v354
      %414 = vmatpush.msra.mxu0 %v352
      %415 = vmatmul.f32.gmra.mxu0 %v377
      %v416 = vpop.f32.mrf.mxu0
      %v417 = vadd.f32 %v373, %v416
      %418 = vdwg.mxu0
      %vm419 = vcmp.gt.f32.partialorder %v397, 0.0
      %vm420 = vcmp.gt.f32.partialorder %v417, 0.0
      %v421 = vmul.f32 %v397, 0.01
      %v422 = vmul.f32 %v417, 0.01
      %v423 = vsel %vm419, %v397, %v421
      %v424 = vsel %vm420, %v417, %v422
      %425 = vrot.lane.b32.xlu0 %v423, 17
      %v426 = vpop.permute.xlu0 %425
      %427 = vrot.lane.b32.xlu0 %v424, 17
      %v428 = vpop.permute.xlu0 %427
      %v429 = vsel %vm209, %v426, %v428
      %v430 = vsel %vm209, %v428, %v426
      %v431 = vld [vmem:[%s3] ss:$8 sm:$0x3]
      %v433 = vperm.slane %v431, 0
      %v434 = vperm.slane %v431, 1
      %v437 = vmul.f32 %v430, %v433
      %v438 = vmul.f32 %v429, %v434
      %439 = vst [vmem:[#allocation2] sm:$0xff] %v437
      %440 = vst [vmem:[#allocation2 + $0x8] sm:$0xff] %v438
      %441 = vrot.lane.b32.xlu0 %v423, 16
      %v442 = vpop.permute.xlu0 %441
      %443 = vrot.lane.b32.xlu0 %v424, 16
      %v444 = vpop.permute.xlu0 %443
      %v445 = vsel %vm226, %v442, %v444
      %v446 = vsel %vm226, %v444, %v442
      %v447 = vld [vmem:[%s229] ss:$8 sm:$0x3]
      %v449 = vperm.slane %v447, 0
      %v450 = vperm.slane %v447, 1
      %v453 = vmul.f32 %v446, %v449
      %v454 = vmul.f32 %v445, %v450
      %455 = vst [vmem:[#allocation2 + $0x10] sm:$0xff] %v453
      %456 = vst [vmem:[#allocation2 + $0x18] sm:$0xff] %v454
      %457 = vrot.lane.b32.xlu0 %v423, 15
      %v458 = vpop.permute.xlu0 %457
      %459 = vrot.lane.b32.xlu0 %v424, 15
      %v460 = vpop.permute.xlu0 %459
      %v461 = vsel %vm244, %v458, %v460
      %v462 = vsel %vm244, %v460, %v458
      %v463 = vld [vmem:[%s247] ss:$8 sm:$0x3]
      %v465 = vperm.slane %v463, 0
      %v466 = vperm.slane %v463, 1
      %v469 = vmul.f32 %v462, %v465
      %v470 = vmul.f32 %v461, %v466
      %471 = vst [vmem:[#allocation2 + $0x20] sm:$0xff] %v469
      %472 = vst [vmem:[#allocation2 + $0x28] sm:$0xff] %v470
      %473 = vrot.lane.b32.xlu0 %v423, 1
      %v474 = vpop.permute.xlu0 %473
      %475 = vrot.lane.b32.xlu0 %v424, 1
      %v476 = vpop.permute.xlu0 %475
      %v477 = vsel %vm262, %v474, %v476
      %v478 = vsel %vm262, %v476, %v474
      %v479 = vld [vmem:[%s265] ss:$8 sm:$0x3]
      %v481 = vperm.slane %v479, 0
      %v482 = vperm.slane %v479, 1
      %v485 = vmul.f32 %v478, %v481
      %v486 = vmul.f32 %v477, %v482
      %487 = vst [vmem:[#allocation2 + $0x30] sm:$0xff] %v485
      %488 = vst [vmem:[#allocation2 + $0x38] sm:$0xff] %v486
      %489 = vst [vmem:[#allocation2 + $0x40] sm:$0xff] %v423
      %490 = vst [vmem:[#allocation2 + $0x48] sm:$0xff] %v424
      %491 = vrot.lane.b32.xlu0 %v423, 127
      %v492 = vpop.permute.xlu0 %491
      %493 = vrot.lane.b32.xlu0 %v424, 127
      %v494 = vpop.permute.xlu0 %493
      %v495 = vsel %vm282, %v492, %v494
      %v496 = vsel %vm282, %v494, %v492
      %v497 = vld [vmem:[%s285] ss:$8 sm:$0x3]
      %v499 = vperm.slane %v497, 0
      %v500 = vperm.slane %v497, 1
      %v503 = vmul.f32 %v495, %v499
      %v504 = vmul.f32 %v496, %v500
      %505 = vst [vmem:[#allocation2 + $0x50] sm:$0xff] %v503
      %506 = vst [vmem:[#allocation2 + $0x58] sm:$0xff] %v504
      %507 = vrot.lane.b32.xlu0 %v423, 113
      %v508 = vpop.permute.xlu0 %507
      %509 = vrot.lane.b32.xlu0 %v424, 113
      %v510 = vpop.permute.xlu0 %509
      %v511 = vsel %vm300, %v508, %v510
      %v512 = vsel %vm300, %v510, %v508
      %v513 = vld [vmem:[%s303] ss:$8 sm:$0x3]
      %v515 = vperm.slane %v513, 0
      %v516 = vperm.slane %v513, 1
      %v519 = vmul.f32 %v511, %v515
      %v520 = vmul.f32 %v512, %v516
      %521 = vst [vmem:[#allocation2 + $0x60] sm:$0xff] %v519
      %522 = vst [vmem:[#allocation2 + $0x68] sm:$0xff] %v520
      %523 = vrot.lane.b32.xlu0 %v423, 112
      %v524 = vpop.permute.xlu0 %523
      %525 = vrot.lane.b32.xlu0 %v424, 112
      %v526 = vpop.permute.xlu0 %525
      %v527 = vsel %vm318, %v524, %v526
      %v528 = vsel %vm318, %v526, %v524
      %v529 = vld [vmem:[%s321] ss:$8 sm:$0x3]
      %v531 = vperm.slane %v529, 0
      %v532 = vperm.slane %v529, 1
      %v535 = vmul.f32 %v527, %v531
      %v536 = vmul.f32 %v528, %v532
      %537 = vst [vmem:[#allocation2 + $0x70] sm:$0xff] %v535
      %538 = vst [vmem:[#allocation2 + $0x78] sm:$0xff] %v536
      %539 = vrot.lane.b32.xlu0 %v423, 111
      %v540 = vpop.permute.xlu0 %539
      %541 = vrot.lane.b32.xlu0 %v424, 111
      %v542 = vpop.permute.xlu0 %541
      %v543 = vsel %vm336, %v540, %v542
      %v544 = vsel %vm336, %v542, %v540
      %v545 = vld [vmem:[%s339] ss:$8 sm:$0x3]
      %v547 = vperm.slane %v545, 0
      %v548 = vperm.slane %v545, 1
      %v551 = vmul.f32 %v543, %v547
      %v552 = vmul.f32 %v544, %v548
      %553 = vst [vmem:[#allocation2 + $0x80] sm:$0xff] %v551
      %554 = vst [vmem:[#allocation2 + $0x88] sm:$0xff] %v552
      %s555 = scalar_lea.vmem %s1, 8
      %v556 = vld [vmem:[%s555] sm:$0xff]
      %v557 = vld [vmem:[#allocation2] sm:$0xff]
      %v558 = vld [vmem:[#allocation2 + $0x8] sm:$0xff]
      %v559 = vld [vmem:[#allocation2 + $0x10] sm:$0xff]
      %v560 = vld [vmem:[#allocation2 + $0x18] sm:$0xff]
      %v561 = vld [vmem:[#allocation2 + $0x20] sm:$0xff]
      %v562 = vld [vmem:[#allocation2 + $0x28] sm:$0xff]
      %v563 = vld [vmem:[#allocation2 + $0x30] sm:$0xff]
      %v564 = vld [vmem:[#allocation2 + $0x38] sm:$0xff]
      %v565 = vld [vmem:[#allocation2 + $0x40] sm:$0xff]
      %v566 = vld [vmem:[#allocation2 + $0x48] sm:$0xff]
      %v567 = vld [vmem:[#allocation2 + $0x50] sm:$0xff]
      %v568 = vld [vmem:[#allocation2 + $0x58] sm:$0xff]
      %v569 = vld [vmem:[#allocation2 + $0x60] sm:$0xff]
      %v570 = vld [vmem:[#allocation2 + $0x68] sm:$0xff]
      %v571 = vld [vmem:[#allocation2 + $0x70] sm:$0xff]
      %v572 = vld [vmem:[#allocation2 + $0x78] sm:$0xff]
      %v573 = vld [vmem:[#allocation2 + $0x80] sm:$0xff]
      %v574 = vld [vmem:[#allocation2 + $0x88] sm:$0xff]
      %s575 = scalar_lea.vmem %s2, 8
      %v576 = vld [vmem:[%s575] sm:$0xff]
      %578 = vset.pattern.permute.xlu0 0
      %579 = vperm.xlu0 %578, %v576
      %v580 = vpop.permute.xlu0 %579
      %v583 = vsel %vm375, %v556, 0
      %585 = vmatpush.msra.mxu0 0.0
      %586 = vmatpush.msra.mxu0 0.0
      %587 = vmatpush.msra.mxu0 0.0
      %588 = vmatpush.msra.mxu0 0.0
      %589 = vmatpush.msra.mxu0 0.0
      %590 = vmatpush.msra.mxu0 0.0
      %591 = vmatpush.msra.mxu0 0.0
      %592 = vmatpush.msra.mxu0 %v573
      %593 = vmatpush.msra.mxu0 %v571
      %594 = vmatpush.msra.mxu0 %v569
      %595 = vmatpush.msra.mxu0 %v567
      %596 = vmatpush.msra.mxu0 %v565
      %597 = vmatpush.msra.mxu0 %v563
      %598 = vmatpush.msra.mxu0 %v561
      %599 = vmatpush.msra.mxu0 %v559
      %600 = vmatpush.msra.mxu0 %v557
      %601 = vmatmul.f32.gmra.mxu0 %v583
      %v602 = vpop.f32.mrf.mxu0
      %v603 = vadd.f32 %v580, %v602
      %604 = vdwg.mxu0
      %605 = vmatpush.msra.mxu0 0.0
      %606 = vmatpush.msra.mxu0 0.0
      %607 = vmatpush.msra.mxu0 0.0
      %608 = vmatpush.msra.mxu0 0.0
      %609 = vmatpush.msra.mxu0 0.0
      %610 = vmatpush.msra.mxu0 0.0
      %611 = vmatpush.msra.mxu0 0.0
      %612 = vmatpush.msra.mxu0 %v574
      %613 = vmatpush.msra.mxu0 %v572
      %614 = vmatpush.msra.mxu0 %v570
      %615 = vmatpush.msra.mxu0 %v568
      %616 = vmatpush.msra.mxu0 %v566
      %617 = vmatpush.msra.mxu0 %v564
      %618 = vmatpush.msra.mxu0 %v562
      %619 = vmatpush.msra.mxu0 %v560
      %620 = vmatpush.msra.mxu0 %v558
      %621 = vmatmul.f32.gmra.mxu0 %v583
      %v622 = vpop.f32.mrf.mxu0
      %v623 = vadd.f32 %v580, %v622
      %624 = vdwg.mxu0
      %vm625 = vcmp.gt.f32.partialorder %v603, 0.0
      %vm626 = vcmp.gt.f32.partialorder %v623, 0.0
      %v627 = vmul.f32 %v603, 0.01
      %v628 = vmul.f32 %v623, 0.01
      %v629 = vsel %vm625, %v603, %v627
      %v630 = vsel %vm626, %v623, %v628
      %631 = vst [vmem:[%s199] sm:$0xff] %v629
      %632 = vst [vmem:[%s199 + $0x8] sm:$0xff] %v630
      %s633 = smul.u32 2, %s15
      %p634 = scmp.lt.s32.totalorder %s633, 3
      %s635 = scalar_select %p634, %s633, 3
      %s636 = smul.addr %s635, 8
      %s637 = scalar_lea.vmem %s4, %s636
      // Predicated region
      $region37: #{conv2dblock_forward.1} parent=35 // pred_check
        %p638 = pneg %p122
      $region38: #{conv2dblock_forward.1} parent=35 // pred_check_branch
        %640 = sbr.rel (%p638) target = $region40
      $region39: #{conv2dblock_forward.1} parent=35 // pred_region
        %s641 = smul.u32 2, %s15
      $region40: #{conv2dblock_forward.1} parent=35 // pred_fallthru
        _
    $region36: #{conv2dblock_forward.1} parent=5 // pred_fallthru
      _
    %p642 = scmp.le.s32.totalorder 2, %s10
    // Predicated region
    $region41: #{conv2dblock_forward.1} parent=5 // pred_check
      %p643 = pneg %p642
    $region42: #{conv2dblock_forward.1} parent=5 // pred_check_branch
      %645 = sbr.rel (%p643) target = $region44
    $region43: #{conv2dblock_forward.1} parent=5 // pred_region
      %s646 = ssub.s32 %s10, 2
      // Predicated region
      $region45: #{conv2dblock_forward.1} parent=43 // pred_check
        %p647 = pneg %p128
      $region46: #{conv2dblock_forward.1} parent=43 // pred_check_branch
        %649 = sbr.rel (%p647) target = $region48
      $region47: #{conv2dblock_forward.1} parent=43 // pred_region
        %s650 = smul.u32 2, %s16
        %p651 = scmp.lt.s32.totalorder %s650, 3
        %s652 = scalar_select %p651, %s650, 3
        %s653 = smul.addr %s652, 8
        %s654 = scalar_lea.vmem %s4, %s653
      $region48: #{conv2dblock_forward.1} parent=43 // pred_fallthru
        _
    $region44: #{conv2dblock_forward.1} parent=5 // pred_fallthru
      _
  $region6: #{conv2dblock_forward.1} parent=0 // loop_footer
    %s14 = sadd.s32 1, %s10
  $region7: #{conv2dblock_forward.1} parent=0 // loop_footer_branch
    %9 = sbr.rel target = $region3
  $region8: #{conv2dblock_forward.1} parent=0 // loop_exit
    _

</llo_original>
